<compile_context>
chip_gen: v7x
topology: tpu7x:2x2x1
jax: 0.10.0
libtpu: 0.0.40
codegen_flags: <defaults>
</compile_context>

<pallas_src>
import jax
import jax.numpy as jnp
from jax.experimental import pallas as pl
from jax.experimental.pallas import tpu as pltpu


def _pick_chunks(total, max_chunks=8):
    """Largest divisor of `total` that is <= max_chunks (static, compile-time)."""
    for c in range(max_chunks, 0, -1):
        if total % c == 0:
            return c
    return 1


def _make_dma_copy_kernel(n_chunks):
    def kernel(x_hbm, o_hbm, sem):
        # Issue all chunk DMAs first (multiple descriptors in flight), then
        # wait on each.  Pure DMA-engine HBM copy: no VMEM round trip, no
        # vector load/store slots, no (8,128) block-tiling constraints.
        for c in range(n_chunks):
            pltpu.make_async_copy(x_hbm.at[c], o_hbm.at[c], sem.at[c]).start()
        for c in range(n_chunks):
            pltpu.make_async_copy(x_hbm.at[c], o_hbm.at[c], sem.at[c]).wait()

    return kernel


def to_transformer(x):
    """Pallas equivalent of ToTransformer.forward.

    x: (A, B, C) array.  Returns an array of shape (B, A, C) containing the
    same elements in the same row-major order (torch .view semantics on a
    contiguous tensor — NOT a transpose).
    """
    A, B, C = x.shape
    total = A * B * C
    n_chunks = _pick_chunks(total)
    chunk = total // n_chunks

    # Metadata-only reshape to a flat chunked buffer (element order unchanged).
    flat = x.reshape(n_chunks, chunk)

    out_flat = pl.pallas_call(
        _make_dma_copy_kernel(n_chunks),
        out_shape=jax.ShapeDtypeStruct((n_chunks, chunk), x.dtype),
        in_specs=[pl.BlockSpec(memory_space=pl.ANY)],   # raw HBM ref, no auto-DMA
        out_specs=pl.BlockSpec(memory_space=pl.ANY),    # raw HBM ref, no auto-DMA
        scratch_shapes=[pltpu.SemaphoreType.DMA((n_chunks,))],
    )(flat)

    # Metadata-only reshape to the .view target shape.
    return out_flat.reshape(B, A, C)


if __name__ == "__main__":
    key = jax.random.PRNGKey(0)
    # Shape consistent with the forward: (seq=8, batch=2, hidden=32).
    A, B, C = 8, 2, 32
    x = jax.random.normal(key, (A, B, C), dtype=jnp.float32)

    y = to_transformer(x)
    jax.block_until_ready(y)

    # Reference: torch .view on a contiguous tensor == row-major reshape.
    y_ref = x.reshape(B, A, C)

    assert y.shape == (B, A, C), y.shape
    assert jnp.array_equal(y, y_ref), "mismatch vs .view semantics"

    print("KERNEL_OK")
</pallas_src>

<mosaic_0001>
module attributes {stable_mosaic.version = 11 : i64} {
  func.func @kernel(%arg0: memref<8x64xf32, #tpu.memory_space<any>>, %arg1: memref<8x64xf32, #tpu.memory_space<any>>, %arg2: memref<8x!tpu.dma_semaphore, #tpu.memory_space<semaphore_mem>>) attributes {dimension_semantics = [], scalar_prefetch = 0 : i64, scratch_operands = 1 : i64, tpu.core_type = #tpu.core_type<tc>} {
    %c0_i32 = arith.constant 0 : i32
    %c0_i32_0 = arith.constant 0 : i32
    %c0_i32_1 = arith.constant 0 : i32
    %c0_i32_2 = arith.constant 0 : i32
    %0 = tpu.memref_slice %arg0[%c0_i32, %c0_i32_2] : memref<8x64xf32, #tpu.memory_space<any>> -> memref<1x64xf32, #tpu.memory_space<any>>
    %1 = tpu.memref_squeeze %0 : memref<1x64xf32, #tpu.memory_space<any>> -> memref<64xf32, #tpu.memory_space<any>>
    %c0_i32_3 = arith.constant 0 : i32
    %2 = tpu.memref_slice %arg1[%c0_i32_0, %c0_i32_3] : memref<8x64xf32, #tpu.memory_space<any>> -> memref<1x64xf32, #tpu.memory_space<any>>
    %3 = tpu.memref_squeeze %2 : memref<1x64xf32, #tpu.memory_space<any>> -> memref<64xf32, #tpu.memory_space<any>>
    %4 = tpu.memref_slice %arg2[%c0_i32_1] : memref<8x!tpu.dma_semaphore, #tpu.memory_space<semaphore_mem>> -> memref<1x!tpu.dma_semaphore, #tpu.memory_space<semaphore_mem>>
    %5 = tpu.memref_squeeze %4 : memref<1x!tpu.dma_semaphore, #tpu.memory_space<semaphore_mem>> -> memref<!tpu.dma_semaphore, #tpu.memory_space<semaphore_mem>>
    tpu.enqueue_dma source(%1 : memref<64xf32, #tpu.memory_space<any>>) target(%3 : memref<64xf32, #tpu.memory_space<any>>) target_semaphore(%5 : memref<!tpu.dma_semaphore, #tpu.memory_space<semaphore_mem>>)
    %c1_i32 = arith.constant 1 : i32
    %c1_i32_4 = arith.constant 1 : i32
    %c1_i32_5 = arith.constant 1 : i32
    %c0_i32_6 = arith.constant 0 : i32
    %6 = tpu.memref_slice %arg0[%c1_i32, %c0_i32_6] : memref<8x64xf32, #tpu.memory_space<any>> -> memref<1x64xf32, #tpu.memory_space<any>>
    %7 = tpu.memref_squeeze %6 : memref<1x64xf32, #tpu.memory_space<any>> -> memref<64xf32, #tpu.memory_space<any>>
    %c0_i32_7 = arith.constant 0 : i32
    %8 = tpu.memref_slice %arg1[%c1_i32_4, %c0_i32_7] : memref<8x64xf32, #tpu.memory_space<any>> -> memref<1x64xf32, #tpu.memory_space<any>>
    %9 = tpu.memref_squeeze %8 : memref<1x64xf32, #tpu.memory_space<any>> -> memref<64xf32, #tpu.memory_space<any>>
    %10 = tpu.memref_slice %arg2[%c1_i32_5] : memref<8x!tpu.dma_semaphore, #tpu.memory_space<semaphore_mem>> -> memref<1x!tpu.dma_semaphore, #tpu.memory_space<semaphore_mem>>
    %11 = tpu.memref_squeeze %10 : memref<1x!tpu.dma_semaphore, #tpu.memory_space<semaphore_mem>> -> memref<!tpu.dma_semaphore, #tpu.memory_space<semaphore_mem>>
    tpu.enqueue_dma source(%7 : memref<64xf32, #tpu.memory_space<any>>) target(%9 : memref<64xf32, #tpu.memory_space<any>>) target_semaphore(%11 : memref<!tpu.dma_semaphore, #tpu.memory_space<semaphore_mem>>)
    %c2_i32 = arith.constant 2 : i32
    %c2_i32_8 = arith.constant 2 : i32
    %c2_i32_9 = arith.constant 2 : i32
    %c0_i32_10 = arith.constant 0 : i32
    %12 = tpu.memref_slice %arg0[%c2_i32, %c0_i32_10] : memref<8x64xf32, #tpu.memory_space<any>> -> memref<1x64xf32, #tpu.memory_space<any>>
    %13 = tpu.memref_squeeze %12 : memref<1x64xf32, #tpu.memory_space<any>> -> memref<64xf32, #tpu.memory_space<any>>
    %c0_i32_11 = arith.constant 0 : i32
    %14 = tpu.memref_slice %arg1[%c2_i32_8, %c0_i32_11] : memref<8x64xf32, #tpu.memory_space<any>> -> memref<1x64xf32, #tpu.memory_space<any>>
    %15 = tpu.memref_squeeze %14 : memref<1x64xf32, #tpu.memory_space<any>> -> memref<64xf32, #tpu.memory_space<any>>
    %16 = tpu.memref_slice %arg2[%c2_i32_9] : memref<8x!tpu.dma_semaphore, #tpu.memory_space<semaphore_mem>> -> memref<1x!tpu.dma_semaphore, #tpu.memory_space<semaphore_mem>>
    %17 = tpu.memref_squeeze %16 : memref<1x!tpu.dma_semaphore, #tpu.memory_space<semaphore_mem>> -> memref<!tpu.dma_semaphore, #tpu.memory_space<semaphore_mem>>
    tpu.enqueue_dma source(%13 : memref<64xf32, #tpu.memory_space<any>>) target(%15 : memref<64xf32, #tpu.memory_space<any>>) target_semaphore(%17 : memref<!tpu.dma_semaphore, #tpu.memory_space<semaphore_mem>>)
    %c3_i32 = arith.constant 3 : i32
    %c3_i32_12 = arith.constant 3 : i32
    %c3_i32_13 = arith.constant 3 : i32
    %c0_i32_14 = arith.constant 0 : i32
    %18 = tpu.memref_slice %arg0[%c3_i32, %c0_i32_14] : memref<8x64xf32, #tpu.memory_space<any>> -> memref<1x64xf32, #tpu.memory_space<any>>
    %19 = tpu.memref_squeeze %18 : memref<1x64xf32, #tpu.memory_space<any>> -> memref<64xf32, #tpu.memory_space<any>>
    %c0_i32_15 = arith.constant 0 : i32
    %20 = tpu.memref_slice %arg1[%c3_i32_12, %c0_i32_15] : memref<8x64xf32, #tpu.memory_space<any>> -> memref<1x64xf32, #tpu.memory_space<any>>
    %21 = tpu.memref_squeeze %20 : memref<1x64xf32, #tpu.memory_space<any>> -> memref<64xf32, #tpu.memory_space<any>>
    %22 = tpu.memref_slice %arg2[%c3_i32_13] : memref<8x!tpu.dma_semaphore, #tpu.memory_space<semaphore_mem>> -> memref<1x!tpu.dma_semaphore, #tpu.memory_space<semaphore_mem>>
    %23 = tpu.memref_squeeze %22 : memref<1x!tpu.dma_semaphore, #tpu.memory_space<semaphore_mem>> -> memref<!tpu.dma_semaphore, #tpu.memory_space<semaphore_mem>>
    tpu.enqueue_dma source(%19 : memref<64xf32, #tpu.memory_space<any>>) target(%21 : memref<64xf32, #tpu.memory_space<any>>) target_semaphore(%23 : memref<!tpu.dma_semaphore, #tpu.memory_space<semaphore_mem>>)
    %c4_i32 = arith.constant 4 : i32
    %c4_i32_16 = arith.constant 4 : i32
    %c4_i32_17 = arith.constant 4 : i32
    %c0_i32_18 = arith.constant 0 : i32
    %24 = tpu.memref_slice %arg0[%c4_i32, %c0_i32_18] : memref<8x64xf32, #tpu.memory_space<any>> -> memref<1x64xf32, #tpu.memory_space<any>>
    %25 = tpu.memref_squeeze %24 : memref<1x64xf32, #tpu.memory_space<any>> -> memref<64xf32, #tpu.memory_space<any>>
    %c0_i32_19 = arith.constant 0 : i32
    %26 = tpu.memref_slice %arg1[%c4_i32_16, %c0_i32_19] : memref<8x64xf32, #tpu.memory_space<any>> -> memref<1x64xf32, #tpu.memory_space<any>>
    %27 = tpu.memref_squeeze %26 : memref<1x64xf32, #tpu.memory_space<any>> -> memref<64xf32, #tpu.memory_space<any>>
    %28 = tpu.memref_slice %arg2[%c4_i32_17] : memref<8x!tpu.dma_semaphore, #tpu.memory_space<semaphore_mem>> -> memref<1x!tpu.dma_semaphore, #tpu.memory_space<semaphore_mem>>
    %29 = tpu.memref_squeeze %28 : memref<1x!tpu.dma_semaphore, #tpu.memory_space<semaphore_mem>> -> memref<!tpu.dma_semaphore, #tpu.memory_space<semaphore_mem>>
    tpu.enqueue_dma source(%25 : memref<64xf32, #tpu.memory_space<any>>) target(%27 : memref<64xf32, #tpu.memory_space<any>>) target_semaphore(%29 : memref<!tpu.dma_semaphore, #tpu.memory_space<semaphore_mem>>)
    %c5_i32 = arith.constant 5 : i32
    %c5_i32_20 = arith.constant 5 : i32
    %c5_i32_21 = arith.constant 5 : i32
    %c0_i32_22 = arith.constant 0 : i32
    %30 = tpu.memref_slice %arg0[%c5_i32, %c0_i32_22] : memref<8x64xf32, #tpu.memory_space<any>> -> memref<1x64xf32, #tpu.memory_space<any>>
    %31 = tpu.memref_squeeze %30 : memref<1x64xf32, #tpu.memory_space<any>> -> memref<64xf32, #tpu.memory_space<any>>
    %c0_i32_23 = arith.constant 0 : i32
    %32 = tpu.memref_slice %arg1[%c5_i32_20, %c0_i32_23] : memref<8x64xf32, #tpu.memory_space<any>> -> memref<1x64xf32, #tpu.memory_space<any>>
    %33 = tpu.memref_squeeze %32 : memref<1x64xf32, #tpu.memory_space<any>> -> memref<64xf32, #tpu.memory_space<any>>
    %34 = tpu.memref_slice %arg2[%c5_i32_21] : memref<8x!tpu.dma_semaphore, #tpu.memory_space<semaphore_mem>> -> memref<1x!tpu.dma_semaphore, #tpu.memory_space<semaphore_mem>>
    %35 = tpu.memref_squeeze %34 : memref<1x!tpu.dma_semaphore, #tpu.memory_space<semaphore_mem>> -> memref<!tpu.dma_semaphore, #tpu.memory_space<semaphore_mem>>
    tpu.enqueue_dma source(%31 : memref<64xf32, #tpu.memory_space<any>>) target(%33 : memref<64xf32, #tpu.memory_space<any>>) target_semaphore(%35 : memref<!tpu.dma_semaphore, #tpu.memory_space<semaphore_mem>>)
    %c6_i32 = arith.constant 6 : i32
    %c6_i32_24 = arith.constant 6 : i32
    %c6_i32_25 = arith.constant 6 : i32
    %c0_i32_26 = arith.constant 0 : i32
    %36 = tpu.memref_slice %arg0[%c6_i32, %c0_i32_26] : memref<8x64xf32, #tpu.memory_space<any>> -> memref<1x64xf32, #tpu.memory_space<any>>
    %37 = tpu.memref_squeeze %36 : memref<1x64xf32, #tpu.memory_space<any>> -> memref<64xf32, #tpu.memory_space<any>>
    %c0_i32_27 = arith.constant 0 : i32
    %38 = tpu.memref_slice %arg1[%c6_i32_24, %c0_i32_27] : memref<8x64xf32, #tpu.memory_space<any>> -> memref<1x64xf32, #tpu.memory_space<any>>
    %39 = tpu.memref_squeeze %38 : memref<1x64xf32, #tpu.memory_space<any>> -> memref<64xf32, #tpu.memory_space<any>>
    %40 = tpu.memref_slice %arg2[%c6_i32_25] : memref<8x!tpu.dma_semaphore, #tpu.memory_space<semaphore_mem>> -> memref<1x!tpu.dma_semaphore, #tpu.memory_space<semaphore_mem>>
    %41 = tpu.memref_squeeze %40 : memref<1x!tpu.dma_semaphore, #tpu.memory_space<semaphore_mem>> -> memref<!tpu.dma_semaphore, #tpu.memory_space<semaphore_mem>>
    tpu.enqueue_dma source(%37 : memref<64xf32, #tpu.memory_space<any>>) target(%39 : memref<64xf32, #tpu.memory_space<any>>) target_semaphore(%41 : memref<!tpu.dma_semaphore, #tpu.memory_space<semaphore_mem>>)
    %c7_i32 = arith.constant 7 : i32
    %c7_i32_28 = arith.constant 7 : i32
    %c7_i32_29 = arith.constant 7 : i32
    %c0_i32_30 = arith.constant 0 : i32
    %42 = tpu.memref_slice %arg0[%c7_i32, %c0_i32_30] : memref<8x64xf32, #tpu.memory_space<any>> -> memref<1x64xf32, #tpu.memory_space<any>>
    %43 = tpu.memref_squeeze %42 : memref<1x64xf32, #tpu.memory_space<any>> -> memref<64xf32, #tpu.memory_space<any>>
    %c0_i32_31 = arith.constant 0 : i32
    %44 = tpu.memref_slice %arg1[%c7_i32_28, %c0_i32_31] : memref<8x64xf32, #tpu.memory_space<any>> -> memref<1x64xf32, #tpu.memory_space<any>>
    %45 = tpu.memref_squeeze %44 : memref<1x64xf32, #tpu.memory_space<any>> -> memref<64xf32, #tpu.memory_space<any>>
    %46 = tpu.memref_slice %arg2[%c7_i32_29] : memref<8x!tpu.dma_semaphore, #tpu.memory_space<semaphore_mem>> -> memref<1x!tpu.dma_semaphore, #tpu.memory_space<semaphore_mem>>
    %47 = tpu.memref_squeeze %46 : memref<1x!tpu.dma_semaphore, #tpu.memory_space<semaphore_mem>> -> memref<!tpu.dma_semaphore, #tpu.memory_space<semaphore_mem>>
    tpu.enqueue_dma source(%43 : memref<64xf32, #tpu.memory_space<any>>) target(%45 : memref<64xf32, #tpu.memory_space<any>>) target_semaphore(%47 : memref<!tpu.dma_semaphore, #tpu.memory_space<semaphore_mem>>)
    %c0_i32_32 = arith.constant 0 : i32
    %c0_i32_33 = arith.constant 0 : i32
    %c0_i32_34 = arith.constant 0 : i32
    %c0_i32_35 = arith.constant 0 : i32
    %48 = tpu.memref_slice %arg0[%c0_i32_32, %c0_i32_35] : memref<8x64xf32, #tpu.memory_space<any>> -> memref<1x64xf32, #tpu.memory_space<any>>
    %49 = tpu.memref_squeeze %48 : memref<1x64xf32, #tpu.memory_space<any>> -> memref<64xf32, #tpu.memory_space<any>>
    %c0_i32_36 = arith.constant 0 : i32
    %50 = tpu.memref_slice %arg1[%c0_i32_33, %c0_i32_36] : memref<8x64xf32, #tpu.memory_space<any>> -> memref<1x64xf32, #tpu.memory_space<any>>
    %51 = tpu.memref_squeeze %50 : memref<1x64xf32, #tpu.memory_space<any>> -> memref<64xf32, #tpu.memory_space<any>>
    %52 = tpu.memref_slice %arg2[%c0_i32_34] : memref<8x!tpu.dma_semaphore, #tpu.memory_space<semaphore_mem>> -> memref<1x!tpu.dma_semaphore, #tpu.memory_space<semaphore_mem>>
    %53 = tpu.memref_squeeze %52 : memref<1x!tpu.dma_semaphore, #tpu.memory_space<semaphore_mem>> -> memref<!tpu.dma_semaphore, #tpu.memory_space<semaphore_mem>>
    tpu.wait_dma2 semaphore(%53 : memref<!tpu.dma_semaphore, #tpu.memory_space<semaphore_mem>>) src(%49 : memref<64xf32, #tpu.memory_space<any>>) dst(%51 : memref<64xf32, #tpu.memory_space<any>>)
    %c1_i32_37 = arith.constant 1 : i32
    %c1_i32_38 = arith.constant 1 : i32
    %c1_i32_39 = arith.constant 1 : i32
    %c0_i32_40 = arith.constant 0 : i32
    %54 = tpu.memref_slice %arg0[%c1_i32_37, %c0_i32_40] : memref<8x64xf32, #tpu.memory_space<any>> -> memref<1x64xf32, #tpu.memory_space<any>>
    %55 = tpu.memref_squeeze %54 : memref<1x64xf32, #tpu.memory_space<any>> -> memref<64xf32, #tpu.memory_space<any>>
    %c0_i32_41 = arith.constant 0 : i32
    %56 = tpu.memref_slice %arg1[%c1_i32_38, %c0_i32_41] : memref<8x64xf32, #tpu.memory_space<any>> -> memref<1x64xf32, #tpu.memory_space<any>>
    %57 = tpu.memref_squeeze %56 : memref<1x64xf32, #tpu.memory_space<any>> -> memref<64xf32, #tpu.memory_space<any>>
    %58 = tpu.memref_slice %arg2[%c1_i32_39] : memref<8x!tpu.dma_semaphore, #tpu.memory_space<semaphore_mem>> -> memref<1x!tpu.dma_semaphore, #tpu.memory_space<semaphore_mem>>
    %59 = tpu.memref_squeeze %58 : memref<1x!tpu.dma_semaphore, #tpu.memory_space<semaphore_mem>> -> memref<!tpu.dma_semaphore, #tpu.memory_space<semaphore_mem>>
    tpu.wait_dma2 semaphore(%59 : memref<!tpu.dma_semaphore, #tpu.memory_space<semaphore_mem>>) src(%55 : memref<64xf32, #tpu.memory_space<any>>) dst(%57 : memref<64xf32, #tpu.memory_space<any>>)
    %c2_i32_42 = arith.constant 2 : i32
    %c2_i32_43 = arith.constant 2 : i32
    %c2_i32_44 = arith.constant 2 : i32
    %c0_i32_45 = arith.constant 0 : i32
    %60 = tpu.memref_slice %arg0[%c2_i32_42, %c0_i32_45] : memref<8x64xf32, #tpu.memory_space<any>> -> memref<1x64xf32, #tpu.memory_space<any>>
    %61 = tpu.memref_squeeze %60 : memref<1x64xf32, #tpu.memory_space<any>> -> memref<64xf32, #tpu.memory_space<any>>
    %c0_i32_46 = arith.constant 0 : i32
    %62 = tpu.memref_slice %arg1[%c2_i32_43, %c0_i32_46] : memref<8x64xf32, #tpu.memory_space<any>> -> memref<1x64xf32, #tpu.memory_space<any>>
    %63 = tpu.memref_squeeze %62 : memref<1x64xf32, #tpu.memory_space<any>> -> memref<64xf32, #tpu.memory_space<any>>
    %64 = tpu.memref_slice %arg2[%c2_i32_44] : memref<8x!tpu.dma_semaphore, #tpu.memory_space<semaphore_mem>> -> memref<1x!tpu.dma_semaphore, #tpu.memory_space<semaphore_mem>>
    %65 = tpu.memref_squeeze %64 : memref<1x!tpu.dma_semaphore, #tpu.memory_space<semaphore_mem>> -> memref<!tpu.dma_semaphore, #tpu.memory_space<semaphore_mem>>
    tpu.wait_dma2 semaphore(%65 : memref<!tpu.dma_semaphore, #tpu.memory_space<semaphore_mem>>) src(%61 : memref<64xf32, #tpu.memory_space<any>>) dst(%63 : memref<64xf32, #tpu.memory_space<any>>)
    %c3_i32_47 = arith.constant 3 : i32
    %c3_i32_48 = arith.constant 3 : i32
    %c3_i32_49 = arith.constant 3 : i32
    %c0_i32_50 = arith.constant 0 : i32
    %66 = tpu.memref_slice %arg0[%c3_i32_47, %c0_i32_50] : memref<8x64xf32, #tpu.memory_space<any>> -> memref<1x64xf32, #tpu.memory_space<any>>
    %67 = tpu.memref_squeeze %66 : memref<1x64xf32, #tpu.memory_space<any>> -> memref<64xf32, #tpu.memory_space<any>>
    %c0_i32_51 = arith.constant 0 : i32
    %68 = tpu.memref_slice %arg1[%c3_i32_48, %c0_i32_51] : memref<8x64xf32, #tpu.memory_space<any>> -> memref<1x64xf32, #tpu.memory_space<any>>
    %69 = tpu.memref_squeeze %68 : memref<1x64xf32, #tpu.memory_space<any>> -> memref<64xf32, #tpu.memory_space<any>>
    %70 = tpu.memref_slice %arg2[%c3_i32_49] : memref<8x!tpu.dma_semaphore, #tpu.memory_space<semaphore_mem>> -> memref<1x!tpu.dma_semaphore, #tpu.memory_space<semaphore_mem>>
    %71 = tpu.memref_squeeze %70 : memref<1x!tpu.dma_semaphore, #tpu.memory_space<semaphore_mem>> -> memref<!tpu.dma_semaphore, #tpu.memory_space<semaphore_mem>>
    tpu.wait_dma2 semaphore(%71 : memref<!tpu.dma_semaphore, #tpu.memory_space<semaphore_mem>>) src(%67 : memref<64xf32, #tpu.memory_space<any>>) dst(%69 : memref<64xf32, #tpu.memory_space<any>>)
    %c4_i32_52 = arith.constant 4 : i32
    %c4_i32_53 = arith.constant 4 : i32
    %c4_i32_54 = arith.constant 4 : i32
    %c0_i32_55 = arith.constant 0 : i32
    %72 = tpu.memref_slice %arg0[%c4_i32_52, %c0_i32_55] : memref<8x64xf32, #tpu.memory_space<any>> -> memref<1x64xf32, #tpu.memory_space<any>>
    %73 = tpu.memref_squeeze %72 : memref<1x64xf32, #tpu.memory_space<any>> -> memref<64xf32, #tpu.memory_space<any>>
    %c0_i32_56 = arith.constant 0 : i32
    %74 = tpu.memref_slice %arg1[%c4_i32_53, %c0_i32_56] : memref<8x64xf32, #tpu.memory_space<any>> -> memref<1x64xf32, #tpu.memory_space<any>>
    %75 = tpu.memref_squeeze %74 : memref<1x64xf32, #tpu.memory_space<any>> -> memref<64xf32, #tpu.memory_space<any>>
    %76 = tpu.memref_slice %arg2[%c4_i32_54] : memref<8x!tpu.dma_semaphore, #tpu.memory_space<semaphore_mem>> -> memref<1x!tpu.dma_semaphore, #tpu.memory_space<semaphore_mem>>
    %77 = tpu.memref_squeeze %76 : memref<1x!tpu.dma_semaphore, #tpu.memory_space<semaphore_mem>> -> memref<!tpu.dma_semaphore, #tpu.memory_space<semaphore_mem>>
    tpu.wait_dma2 semaphore(%77 : memref<!tpu.dma_semaphore, #tpu.memory_space<semaphore_mem>>) src(%73 : memref<64xf32, #tpu.memory_space<any>>) dst(%75 : memref<64xf32, #tpu.memory_space<any>>)
    %c5_i32_57 = arith.constant 5 : i32
    %c5_i32_58 = arith.constant 5 : i32
    %c5_i32_59 = arith.constant 5 : i32
    %c0_i32_60 = arith.constant 0 : i32
    %78 = tpu.memref_slice %arg0[%c5_i32_57, %c0_i32_60] : memref<8x64xf32, #tpu.memory_space<any>> -> memref<1x64xf32, #tpu.memory_space<any>>
    %79 = tpu.memref_squeeze %78 : memref<1x64xf32, #tpu.memory_space<any>> -> memref<64xf32, #tpu.memory_space<any>>
    %c0_i32_61 = arith.constant 0 : i32
    %80 = tpu.memref_slice %arg1[%c5_i32_58, %c0_i32_61] : memref<8x64xf32, #tpu.memory_space<any>> -> memref<1x64xf32, #tpu.memory_space<any>>
    %81 = tpu.memref_squeeze %80 : memref<1x64xf32, #tpu.memory_space<any>> -> memref<64xf32, #tpu.memory_space<any>>
    %82 = tpu.memref_slice %arg2[%c5_i32_59] : memref<8x!tpu.dma_semaphore, #tpu.memory_space<semaphore_mem>> -> memref<1x!tpu.dma_semaphore, #tpu.memory_space<semaphore_mem>>
    %83 = tpu.memref_squeeze %82 : memref<1x!tpu.dma_semaphore, #tpu.memory_space<semaphore_mem>> -> memref<!tpu.dma_semaphore, #tpu.memory_space<semaphore_mem>>
    tpu.wait_dma2 semaphore(%83 : memref<!tpu.dma_semaphore, #tpu.memory_space<semaphore_mem>>) src(%79 : memref<64xf32, #tpu.memory_space<any>>) dst(%81 : memref<64xf32, #tpu.memory_space<any>>)
    %c6_i32_62 = arith.constant 6 : i32
    %c6_i32_63 = arith.constant 6 : i32
    %c6_i32_64 = arith.constant 6 : i32
    %c0_i32_65 = arith.constant 0 : i32
    %84 = tpu.memref_slice %arg0[%c6_i32_62, %c0_i32_65] : memref<8x64xf32, #tpu.memory_space<any>> -> memref<1x64xf32, #tpu.memory_space<any>>
    %85 = tpu.memref_squeeze %84 : memref<1x64xf32, #tpu.memory_space<any>> -> memref<64xf32, #tpu.memory_space<any>>
    %c0_i32_66 = arith.constant 0 : i32
    %86 = tpu.memref_slice %arg1[%c6_i32_63, %c0_i32_66] : memref<8x64xf32, #tpu.memory_space<any>> -> memref<1x64xf32, #tpu.memory_space<any>>
    %87 = tpu.memref_squeeze %86 : memref<1x64xf32, #tpu.memory_space<any>> -> memref<64xf32, #tpu.memory_space<any>>
    %88 = tpu.memref_slice %arg2[%c6_i32_64] : memref<8x!tpu.dma_semaphore, #tpu.memory_space<semaphore_mem>> -> memref<1x!tpu.dma_semaphore, #tpu.memory_space<semaphore_mem>>
    %89 = tpu.memref_squeeze %88 : memref<1x!tpu.dma_semaphore, #tpu.memory_space<semaphore_mem>> -> memref<!tpu.dma_semaphore, #tpu.memory_space<semaphore_mem>>
    tpu.wait_dma2 semaphore(%89 : memref<!tpu.dma_semaphore, #tpu.memory_space<semaphore_mem>>) src(%85 : memref<64xf32, #tpu.memory_space<any>>) dst(%87 : memref<64xf32, #tpu.memory_space<any>>)
    %c7_i32_67 = arith.constant 7 : i32
    %c7_i32_68 = arith.constant 7 : i32
    %c7_i32_69 = arith.constant 7 : i32
    %c0_i32_70 = arith.constant 0 : i32
    %90 = tpu.memref_slice %arg0[%c7_i32_67, %c0_i32_70] : memref<8x64xf32, #tpu.memory_space<any>> -> memref<1x64xf32, #tpu.memory_space<any>>
    %91 = tpu.memref_squeeze %90 : memref<1x64xf32, #tpu.memory_space<any>> -> memref<64xf32, #tpu.memory_space<any>>
    %c0_i32_71 = arith.constant 0 : i32
    %92 = tpu.memref_slice %arg1[%c7_i32_68, %c0_i32_71] : memref<8x64xf32, #tpu.memory_space<any>> -> memref<1x64xf32, #tpu.memory_space<any>>
    %93 = tpu.memref_squeeze %92 : memref<1x64xf32, #tpu.memory_space<any>> -> memref<64xf32, #tpu.memory_space<any>>
    %94 = tpu.memref_slice %arg2[%c7_i32_69] : memref<8x!tpu.dma_semaphore, #tpu.memory_space<semaphore_mem>> -> memref<1x!tpu.dma_semaphore, #tpu.memory_space<semaphore_mem>>
    %95 = tpu.memref_squeeze %94 : memref<1x!tpu.dma_semaphore, #tpu.memory_space<semaphore_mem>> -> memref<!tpu.dma_semaphore, #tpu.memory_space<semaphore_mem>>
    tpu.wait_dma2 semaphore(%95 : memref<!tpu.dma_semaphore, #tpu.memory_space<semaphore_mem>>) src(%91 : memref<64xf32, #tpu.memory_space<any>>) dst(%93 : memref<64xf32, #tpu.memory_space<any>>)
    return
  }
}

</mosaic_0001>

<llo_original>
// kernel: tpu_custom_call.1
$region0: #{tpu_custom_call.1}
  #allocation0 [shape = 'u32[]', space=smem, size = 0x4, offset = 0x4, fixed_abs, tag = 'smem constant byte address 0x4 - core index']
  #allocation1 [shape = 'u32[144,128]{1,0:T(1,128)}', space=vmem, size = 0x12000, scoped, tag = 'internal scratch']
  #allocation2 [shape = 's32[8]{0}', space=sflag, size = 0x20, scoped, tag = 'scratch operand']
  #allocation3 [shape = 's32[]', space=sflag, size = 0x4, offset = 0, fixed_abs, tag = 'sflag constant byte address 0x0 - dummy sync flag']
  #allocation4 [shape = 'u32[0]{0}', space=smem, size = 0, offset = 0, fixed_abs, tag = 'smem constant byte address 0x0 - null']
  #allocation5 [shape = 's32[]', space=sflag, size = 0x4, offset = 0, fixed_abs, tag = 'sflag constant byte address 0x0 - dummy sync flag']
  #allocation6 [shape = 'u32[0]{0}', space=smem, size = 0, offset = 0, fixed_abs, tag = 'smem constant byte address 0x0 - null']
  #allocation7 [shape = 's32[]', space=sflag, size = 0x4, offset = 0, fixed_abs, tag = 'sflag constant byte address 0x0 - dummy sync flag']
  #allocation8 [shape = 'u32[0]{0}', space=smem, size = 0, offset = 0, fixed_abs, tag = 'smem constant byte address 0x0 - null']
  #allocation9 [shape = 's32[]', space=sflag, size = 0x4, offset = 0, fixed_abs, tag = 'sflag constant byte address 0x0 - dummy sync flag']
  #allocation10 [shape = 'u32[0]{0}', space=smem, size = 0, offset = 0, fixed_abs, tag = 'smem constant byte address 0x0 - null']
  #allocation11 [shape = 's32[]', space=sflag, size = 0x4, offset = 0, fixed_abs, tag = 'sflag constant byte address 0x0 - dummy sync flag']
  #allocation12 [shape = 'u32[0]{0}', space=smem, size = 0, offset = 0, fixed_abs, tag = 'smem constant byte address 0x0 - null']
  #allocation13 [shape = 's32[]', space=sflag, size = 0x4, offset = 0, fixed_abs, tag = 'sflag constant byte address 0x0 - dummy sync flag']
  #allocation14 [shape = 'u32[0]{0}', space=smem, size = 0, offset = 0, fixed_abs, tag = 'smem constant byte address 0x0 - null']
  #allocation15 [shape = 's32[]', space=sflag, size = 0x4, offset = 0, fixed_abs, tag = 'sflag constant byte address 0x0 - dummy sync flag']
  #allocation16 [shape = 'u32[0]{0}', space=smem, size = 0, offset = 0, fixed_abs, tag = 'smem constant byte address 0x0 - null']
  #allocation17 [shape = 's32[]', space=sflag, size = 0x4, offset = 0, fixed_abs, tag = 'sflag constant byte address 0x0 - dummy sync flag']
  #allocation18 [shape = 'u32[0]{0}', space=smem, size = 0, offset = 0, fixed_abs, tag = 'smem constant byte address 0x0 - null']
  %s0 = inlined_call_operand.hbm [shape: f32[8,64], index: 0, kind: input, shape index: {}]
  %s1 = inlined_call_operand.hbm [shape: f32[8,64], index: 1, kind: output, shape index: {}]
  %s2 = sld [smem:[#allocation0]]
  $region2: #{tpu_custom_call.1} parent=0
    _
  %s4 = ssub.s32 1, %s2
  %s5 = scalar_select 0, %s4, %s2
  %s7 = sshll.u32 1, 14
  %s8 = sxor.u32 4294967295, %s7
  %s11 = sshll.u32 3, 24
  %s12 = sxor.u32 4294967295, %s11
  %s13 = sand.u32 0, %s12
  %s15 = sor.u32 %s13, 0
  %18 = dma.general %s0, 16, %s1, [#allocation2], [#allocation3], [#allocation4], %s15, 0
  %s19 = scalar_lea.hbm %s0, 16
  %s20 = scalar_lea.hbm %s1, 16
  %s21 = scalar_lea.sflag [#allocation2], 1
  %s23 = sshll.u32 1, 14
  %s24 = sxor.u32 4294967295, %s23
  %s27 = sshll.u32 3, 24
  %s28 = sxor.u32 4294967295, %s27
  %s29 = sand.u32 0, %s28
  %s31 = sor.u32 %s29, 0
  %34 = dma.general %s19, 16, %s20, %s21, [#allocation5], [#allocation6], %s31, 0
  %s35 = scalar_lea.hbm %s0, 32
  %s36 = scalar_lea.hbm %s1, 32
  %s37 = scalar_lea.sflag [#allocation2], 2
  %s39 = sshll.u32 1, 14
  %s40 = sxor.u32 4294967295, %s39
  %s43 = sshll.u32 3, 24
  %s44 = sxor.u32 4294967295, %s43
  %s45 = sand.u32 0, %s44
  %s47 = sor.u32 %s45, 0
  %50 = dma.general %s35, 16, %s36, %s37, [#allocation7], [#allocation8], %s47, 0
  %s51 = scalar_lea.hbm %s0, 48
  %s52 = scalar_lea.hbm %s1, 48
  %s53 = scalar_lea.sflag [#allocation2], 3
  %s55 = sshll.u32 1, 14
  %s56 = sxor.u32 4294967295, %s55
  %s59 = sshll.u32 3, 24
  %s60 = sxor.u32 4294967295, %s59
  %s61 = sand.u32 0, %s60
  %s63 = sor.u32 %s61, 0
  %66 = dma.general %s51, 16, %s52, %s53, [#allocation9], [#allocation10], %s63, 0
  %s67 = scalar_lea.hbm %s0, 64
  %s68 = scalar_lea.hbm %s1, 64
  %s69 = scalar_lea.sflag [#allocation2], 4
  %s71 = sshll.u32 1, 14
  %s72 = sxor.u32 4294967295, %s71
  %s75 = sshll.u32 3, 24
  %s76 = sxor.u32 4294967295, %s75
  %s77 = sand.u32 0, %s76
  %s79 = sor.u32 %s77, 0
  %82 = dma.general %s67, 16, %s68, %s69, [#allocation11], [#allocation12], %s79, 0
  %s83 = scalar_lea.hbm %s0, 80
  %s84 = scalar_lea.hbm %s1, 80
  %s85 = scalar_lea.sflag [#allocation2], 5
  %s87 = sshll.u32 1, 14
  %s88 = sxor.u32 4294967295, %s87
  %s91 = sshll.u32 3, 24
  %s92 = sxor.u32 4294967295, %s91
  %s93 = sand.u32 0, %s92
  %s95 = sor.u32 %s93, 0
  %98 = dma.general %s83, 16, %s84, %s85, [#allocation13], [#allocation14], %s95, 0
  %s99 = scalar_lea.hbm %s0, 96
  %s100 = scalar_lea.hbm %s1, 96
  %s101 = scalar_lea.sflag [#allocation2], 6
  %s103 = sshll.u32 1, 14
  %s104 = sxor.u32 4294967295, %s103
  %s107 = sshll.u32 3, 24
  %s108 = sxor.u32 4294967295, %s107
  %s109 = sand.u32 0, %s108
  %s111 = sor.u32 %s109, 0
  %114 = dma.general %s99, 16, %s100, %s101, [#allocation15], [#allocation16], %s111, 0
  %s115 = scalar_lea.hbm %s0, 112
  %s116 = scalar_lea.hbm %s1, 112
  %s117 = scalar_lea.sflag [#allocation2], 7
  %s119 = sshll.u32 1, 14
  %s120 = sxor.u32 4294967295, %s119
  %s123 = sshll.u32 3, 24
  %s124 = sxor.u32 4294967295, %s123
  %s125 = sand.u32 0, %s124
  %s127 = sor.u32 %s125, 0
  %130 = dma.general %s115, 16, %s116, %s117, [#allocation17], [#allocation18], %s127, 0
  %132 = dma.done [#allocation2], 16
  %134 = dma.done %s21, 16
  %136 = dma.done %s37, 16
  %138 = dma.done %s53, 16
  %140 = dma.done %s69, 16
  %142 = dma.done %s85, 16
  %144 = dma.done %s101, 16
  %146 = dma.done %s117, 16
  %147 = vsyncmov [#allocation2]
  %s148 = vpop.sfrf %147
  %p149 = scmp.eq.s32.totalorder %s148, 0
  %p150 = pneg %p149
  %152 = shalt.err (%p150)
  %s153 = scalar_lea.sflag [#allocation2], 1
  %154 = vsyncmov %s153
  %s155 = vpop.sfrf %154
  %p156 = scmp.eq.s32.totalorder %s155, 0
  %p157 = pneg %p156
  %159 = shalt.err (%p157)
  %s160 = scalar_lea.sflag [#allocation2], 2
  %161 = vsyncmov %s160
  %s162 = vpop.sfrf %161
  %p163 = scmp.eq.s32.totalorder %s162, 0
  %p164 = pneg %p163
  %166 = shalt.err (%p164)
  %s167 = scalar_lea.sflag [#allocation2], 3
  %168 = vsyncmov %s167
  %s169 = vpop.sfrf %168
  %p170 = scmp.eq.s32.totalorder %s169, 0
  %p171 = pneg %p170
  %173 = shalt.err (%p171)
  %s174 = scalar_lea.sflag [#allocation2], 4
  %175 = vsyncmov %s174
  %s176 = vpop.sfrf %175
  %p177 = scmp.eq.s32.totalorder %s176, 0
  %p178 = pneg %p177
  %180 = shalt.err (%p178)
  %s181 = scalar_lea.sflag [#allocation2], 5
  %182 = vsyncmov %s181
  %s183 = vpop.sfrf %182
  %p184 = scmp.eq.s32.totalorder %s183, 0
  %p185 = pneg %p184
  %187 = shalt.err (%p185)
  %s188 = scalar_lea.sflag [#allocation2], 6
  %189 = vsyncmov %s188
  %s190 = vpop.sfrf %189
  %p191 = scmp.eq.s32.totalorder %s190, 0
  %p192 = pneg %p191
  %194 = shalt.err (%p192)
  %s195 = scalar_lea.sflag [#allocation2], 7
  %196 = vsyncmov %s195
  %s197 = vpop.sfrf %196
  %p198 = scmp.eq.s32.totalorder %s197, 0
  %p199 = pneg %p198
  %201 = shalt.err (%p199)

</llo_original>
